<compile_context>
chip_gen: v7x
topology: tpu7x:2x2x1
jax: 0.10.0
libtpu: 0.0.40
codegen_flags: <defaults>
</compile_context>

<pallas_src>
import math
import functools

import jax
import jax.numpy as jnp
import numpy as np
from jax.experimental import pallas as pl
from jax.experimental.pallas import tpu as pltpu


def _round_up(x, m):
    return (x + m - 1) // m * m


def _choose_tile_l(L, B, tile_l):
    """Pick an 8-aligned L-tile that (a) avoids Lp padding waste when possible and
    (b) gives the grid >= 2 steps for megacore when B == 1."""
    L8 = _round_up(L, 8)
    cap = min(_round_up(max(tile_l, 8), 8), L8)
    if B < 2 and L8 >= 16:                       # make >= 2 L-tiles so both TCs get work
        cap = min(cap, _round_up((L8 + 1) // 2, 8))
    if L8 % cap == 0:
        return cap
    # prefer a multiple-of-8 divisor of L8 in [cap/2, cap] -> Lp == L8 (no padded rows)
    t = cap - 8
    while t >= max(cap // 2, 8):
        if L8 % t == 0:
            return t
        t -= 8
    return cap                                   # accept < one tile of padding


def _vmem_limit_bytes(Lp, C, TL, Dp, out_itemsize):
    """Approximate double-buffered pipeline footprint + in-kernel temporaries."""
    lane = 128
    x_blk = _round_up(Lp + 2, 16) * _round_up(max(C, 1), lane) * 2   # bf16, lane-inflated
    w_blk = _round_up(3 * C, 16) * Dp * 2
    pe_blk = _round_up(TL, 16) * Dp * 2
    o_blk = _round_up(TL, 8) * Dp * out_itemsize
    pipeline = 2 * (x_blk + w_blk + pe_blk + o_blk)                   # double buffers
    temps = TL * Dp * 4 * 2 + TL * _round_up(3 * C, lane) * 2         # acc + pe(f32) + x_cat
    est = pipeline + temps + (4 << 20)                                # headroom
    return int(min(max(est, 16 << 20), 96 << 20))


def _data_embedding_kernel(x_ref, w_ref, pe_ref, o_ref, *, tile_l):
    # x_ref : (1, Lp+2, C)  bf16  circularly padded sequence of one batch element
    # w_ref : (3C, Dp)      bf16  fused tap-major conv weight (VMEM-resident, constant)
    # pe_ref: (TL, Dp)      bf16  positional-embedding tile (resident across batch loop)
    # o_ref : (1, TL, Dp)   out   output tile (lane-dense Dp)
    start = pl.multiple_of(pl.program_id(0) * tile_l, 8)
    # one halo-window load; the three taps are in-register sublane slices of it
    x_win = x_ref[0, pl.ds(start, tile_l + 2), :]                      # (TL+2, C)
    x_cat = jnp.concatenate(
        [x_win[0:tile_l], x_win[1:tile_l + 1], x_win[2:tile_l + 2]],
        axis=-1)                                                       # (TL, 3C) bf16
    # one fused MXU matmul, contraction K = 3*C, f32 accumulation
    acc = jnp.dot(x_cat, w_ref[...], preferred_element_type=jnp.float32)   # (TL, Dp) f32
    o_ref[0] = (acc + pe_ref[...].astype(jnp.float32)).astype(o_ref.dtype)


def make_data_embedding(conv_weight, pe_table, seq_len, batch, *, tile_l=512,
                        out_dtype=jnp.float32):
    """Build a jitted forward(x) with all parameter prep hoisted out of the call path.

    conv_weight: (d_model, c_in, 3) f32 ; pe_table: (max_len, d_model) f32.
    """
    D, C, K = conv_weight.shape
    assert K == 3, "TokenEmbedding uses kernel_size=3"
    L = int(seq_len)
    B = int(batch)

    Dp = _round_up(D, 128)                     # lane-dense output width
    TL = _choose_tile_l(L, B, tile_l)          # 8-aligned L tile
    Lp = _round_up(_round_up(L, 8), TL)        # padded sequence length (whole tiles)
    n_lt = Lp // TL

    # ---- one-time parameter prep (hoisted out of the per-call path) ----
    # fused tap-major weight:  W[tap*C + c, d] = conv_weight[d, c, tap]
    w = jnp.transpose(conv_weight, (2, 1, 0)).reshape(3 * C, D)
    w = jnp.pad(w, ((0, 0), (0, Dp - D))).astype(jnp.bfloat16)         # (3C, Dp) bf16
    # pe in bf16 (values in [-1, 1]); upcast to f32 inside the kernel before the add
    pe = jnp.pad(pe_table[:L].astype(jnp.float32),
                 ((0, Lp - L), (0, Dp - D))).astype(jnp.bfloat16)      # (Lp, Dp) bf16

    kernel = functools.partial(_data_embedding_kernel, tile_l=TL)
    vmem_limit = _vmem_limit_bytes(Lp, C, TL, Dp, jnp.dtype(out_dtype).itemsize)

    # TODO(synk): for very long sequences on v7x (64 MiB VMEM) the per-batch resident
    # x_pad block (lane-inflated to 128 lanes for small C) should be replaced by a
    # wrapper-side im2col (B, Lp, 3C) tiled per (j, b); not needed at typical L.
    call = pl.pallas_call(
        kernel,
        out_shape=jax.ShapeDtypeStruct((B, Lp, Dp), out_dtype),
        grid_spec=pltpu.PrefetchScalarGridSpec(
            num_scalar_prefetch=0,
            grid=(n_lt, B),                    # L-tiles outer, batch inner
            in_specs=[
                # full padded sequence of batch b (small bf16 stream, re-DMA'd per step)
                pl.BlockSpec((1, Lp + 2, C), lambda j, b: (b, 0, 0)),
                # fused weight: constant block index -> fetched once, resident
                pl.BlockSpec((3 * C, Dp), lambda j, b: (0, 0)),
                # pe tile: depends only on the OUTER axis -> resident across batch loop
                pl.BlockSpec((TL, Dp), lambda j, b: (j, 0)),
            ],
            out_specs=pl.BlockSpec((1, TL, Dp), lambda j, b: (b, j, 0)),
        ),
        compiler_params=pltpu.CompilerParams(
            dimension_semantics=("parallel", "parallel"),
            vmem_limit_bytes=vmem_limit,
        ),
    )

    def forward(x):
        assert x.shape == (B, L, C), f"expected {(B, L, C)}, got {x.shape}"
        xb = x.astype(jnp.bfloat16)
        # circular halo of one row each side (+ zero tail rows up to Lp; those output
        # rows are discarded by the final slice, so tail contents are irrelevant).
        x_pad = jnp.concatenate(
            [xb[:, L - 1:L, :], xb, xb[:, 0:1, :],
             jnp.zeros((B, Lp - L, C), jnp.bfloat16)],
            axis=1)                                                     # (B, Lp+2, C)
        out = call(x_pad, w, pe)
        if Lp == L and Dp == D:
            return out                          # no-op path (typical prod shapes)
        return out[:, :L, :D]

    return jax.jit(forward)


def data_embedding_forward(x, conv_weight, pe_table, *, tile_l=512, out_dtype=jnp.float32):
    """Convenience one-shot wrapper (prefer make_data_embedding for repeated calls)."""
    B, L, _ = x.shape
    return make_data_embedding(conv_weight, pe_table, L, B,
                               tile_l=tile_l, out_dtype=out_dtype)(x)


def make_positional_embedding(d_model, max_len=5000):
    position = np.arange(0, max_len, dtype=np.float32)[:, None]                  # (max_len, 1)
    div_term = np.exp(np.arange(0, d_model, 2, dtype=np.float32)
                      * -(math.log(10000.0) / d_model))                          # (d_model//2,)
    pe = np.zeros((max_len, d_model), dtype=np.float32)
    pe[:, 0::2] = np.sin(position * div_term)
    pe[:, 1::2] = np.cos(position * div_term)
    return jnp.asarray(pe)


def make_conv_weight(key, c_in, d_model, kernel_size=3):
    # kaiming_normal_(mode='fan_in', nonlinearity='leaky_relu', a=0.01)
    fan_in = c_in * kernel_size
    gain = math.sqrt(2.0 / (1.0 + 0.01 ** 2))
    std = gain / math.sqrt(fan_in)
    return std * jax.random.normal(key, (d_model, c_in, kernel_size), dtype=jnp.float32)


def reference_forward(x, conv_weight, pe_table):
    """Pure-JAX f32 reference of DataEmbedding.forward (dropout p=0.0 == identity)."""
    B, L, C = x.shape
    x_pad = jnp.concatenate([x[:, -1:, :], x, x[:, :1, :]], axis=1)     # (B, L+2, C)
    w = jnp.transpose(conv_weight, (2, 1, 0))                           # (3, C, D)
    y = sum(jnp.einsum("blc,cd->bld", x_pad[:, k:k + L, :], w[k]) for k in range(3))
    return y + pe_table[None, :L, :]


if __name__ == "__main__":
    B, L, c_in, d_model = 2, 8, 4, 32

    key = jax.random.PRNGKey(0)
    kx, kw = jax.random.split(key)

    x = jax.random.normal(kx, (B, L, c_in), dtype=jnp.float32)
    conv_weight = make_conv_weight(kw, c_in, d_model)
    pe_table = make_positional_embedding(d_model)

    fwd = make_data_embedding(conv_weight, pe_table, seq_len=L, batch=B)
    out = jax.block_until_ready(fwd(x))

    ref = reference_forward(x, conv_weight, pe_table)
    assert out.shape == (B, L, d_model)
    # bf16 matmul inputs / bf16 pe (f32 accumulation) -> bf16-appropriate tolerance
    np.testing.assert_allclose(np.asarray(out), np.asarray(ref), rtol=2e-2, atol=2e-2)

    print("KERNEL_OK")
</pallas_src>

<mosaic_0001>
module attributes {stable_mosaic.version = 11 : i64} {
  func.func @_data_embedding_kernel(%arg0: i32, %arg1: i32, %arg2: memref<1x10x4xbf16, #tpu.memory_space<vmem>>, %arg3: memref<12x128xbf16, #tpu.memory_space<vmem>>, %arg4: memref<8x128xbf16, #tpu.memory_space<vmem>>, %arg5: memref<1x8x128xf32, #tpu.memory_space<vmem>>) attributes {dimension_semantics = [#tpu.dimension_semantics<parallel>, #tpu.dimension_semantics<parallel>], iteration_bounds = array<i64: 1, 2>, scalar_prefetch = 0 : i64, scratch_operands = 0 : i64, tpu.core_type = #tpu.core_type<tc>, window_params = [{transform_indices = @transform_0, window_bounds = array<i64: 1, 10, 4>}, {pipeline_mode = #tpu.pipeline_mode<synchronous>, transform_indices = @transform_1, window_bounds = array<i64: 12, 128>}, {transform_indices = @transform_2, window_bounds = array<i64: 8, 128>}, {transform_indices = @transform_3, window_bounds = array<i64: 1, 8, 128>}]} {
    %c8_i32 = arith.constant 8 : i32
    %0 = arith.muli %arg0, %c8_i32 : i32
    %1 = tpu.assume_multiple %0, 8 : i32
    %c0 = arith.constant 0 : index
    %2 = arith.index_cast %1 : i32 to index
    %c0_0 = arith.constant 0 : index
    %3 = vector.load %arg2[%c0, %2, %c0_0] : memref<1x10x4xbf16, #tpu.memory_space<vmem>>, vector<1x10x4xbf16>
    %4 = vector.shape_cast %3 : vector<1x10x4xbf16> to vector<10x4xbf16>
    %5 = vector.extract_strided_slice %4 {offsets = [0, 0], sizes = [8, 4], strides = [1, 1]} : vector<10x4xbf16> to vector<8x4xbf16>
    %6 = vector.extract_strided_slice %4 {offsets = [1, 0], sizes = [8, 4], strides = [1, 1]} : vector<10x4xbf16> to vector<8x4xbf16>
    %7 = vector.extract_strided_slice %4 {offsets = [2, 0], sizes = [8, 4], strides = [1, 1]} : vector<10x4xbf16> to vector<8x4xbf16>
    %8 = tpu.concatenate %5, %6, %7 in 1 : vector<8x4xbf16>, vector<8x4xbf16>, vector<8x4xbf16> -> vector<8x12xbf16>
    %c0_1 = arith.constant 0 : index
    %c0_2 = arith.constant 0 : index
    %9 = vector.load %arg3[%c0_1, %c0_2] : memref<12x128xbf16, #tpu.memory_space<vmem>>, vector<12x128xbf16>
    %cst = arith.constant dense<0.000000e+00> : vector<8x128xf32>
    %10 = tpu.matmul %8, %9, %cst {dimension_numbers = #tpu.dot_dimension_numbers<[1], [0], [0], [1], [0, 0, 1, 1], [], []>} : vector<8x12xbf16>, vector<12x128xbf16>, vector<8x128xf32> -> vector<8x128xf32>
    %c0_3 = arith.constant 0 : index
    %c0_4 = arith.constant 0 : index
    %11 = vector.load %arg4[%c0_3, %c0_4] : memref<8x128xbf16, #tpu.memory_space<vmem>>, vector<8x128xbf16>
    %12 = arith.extf %11 : vector<8x128xbf16> to vector<8x128xf32>
    %13 = arith.addf %10, %12 : vector<8x128xf32>
    %c0_5 = arith.constant 0 : index
    %c0_6 = arith.constant 0 : index
    %c0_7 = arith.constant 0 : index
    %14 = vector.load %arg5[%c0_5, %c0_6, %c0_7] : memref<1x8x128xf32, #tpu.memory_space<vmem>>, vector<1x8x128xf32>
    %15 = vector.shape_cast %14 : vector<1x8x128xf32> to vector<8x128xf32>
    %16 = vector.shape_cast %13 : vector<8x128xf32> to vector<1x8x128xf32>
    tpu.vector_store %arg5[%c0_5, %c0_6, %c0_7], %16 {strides = array<i32>} : memref<1x8x128xf32, #tpu.memory_space<vmem>>, vector<1x8x128xf32>,
    return
  }
  func.func @transform_0(%arg0: i32, %arg1: i32) -> (i32, i32, i32) {
    %c0_i32 = arith.constant 0 : i32
    %c0_i32_0 = arith.constant 0 : i32
    %c0_i32_1 = arith.constant 0 : i32
    return %arg1, %c0_i32, %c0_i32_0 : i32, i32, i32
  }
  func.func @transform_1(%arg0: i32, %arg1: i32) -> (i32, i32) {
    %c0_i32 = arith.constant 0 : i32
    %c0_i32_0 = arith.constant 0 : i32
    %c0_i32_1 = arith.constant 0 : i32
    return %c0_i32, %c0_i32_0 : i32, i32
  }
  func.func @transform_2(%arg0: i32, %arg1: i32) -> (i32, i32) {
    %c0_i32 = arith.constant 0 : i32
    %c0_i32_0 = arith.constant 0 : i32
    return %arg0, %c0_i32 : i32, i32
  }
  func.func @transform_3(%arg0: i32, %arg1: i32) -> (i32, i32, i32) {
    %c0_i32 = arith.constant 0 : i32
    %c0_i32_0 = arith.constant 0 : i32
    return %arg1, %arg0, %c0_i32 : i32, i32, i32
  }
}

</mosaic_0001>

<llo_original>
// kernel: forward.1
$region0: #{forward.1}
  #allocation0 [shape = 'u32[]', space=smem, size = 0x4, offset = 0x4, fixed_abs, tag = 'smem constant byte address 0x4 - core index']
  #allocation1 [shape = 'u32[144,128]{1,0:T(1,128)}', space=vmem, size = 0x12000, scoped, tag = 'internal scratch']
  %s0 = inlined_call_operand.vmem [shape: bf16[2,10,4], index: 0, kind: input, shape index: {}]
  %s1 = inlined_call_operand.vmem [shape: bf16[12,128], index: 1, kind: input, shape index: {}]
  %s2 = inlined_call_operand.vmem [shape: bf16[8,128], index: 2, kind: input, shape index: {}]
  %s3 = inlined_call_operand.hbm [shape: f32[2,8,128], index: 3, kind: output, shape index: {}]
  %s4 = sld [smem:[#allocation0]]
  $region45: #{forward.1} parent=0
    _
  %s6 = ssub.s32 1, %s4
  %s7 = scalar_select 0, %s6, %s4
  $region1: #{forward.1} parent=0
    #allocation2 [shape = 'u8[8192]{0}', space=vmem, size = 0x2000, scoped, tag = 'output window, operand 0']
    #allocation3 [shape = 's32[2]{0}', space=sflag, size = 0x8, scoped, tag = 'scoped memory for forward.1']
    %8 = vsyncpa [#allocation3], 0
    %s9 = scalar_lea.sflag [#allocation3], 1
    %10 = vsyncpa %s9, 0
    loop: start=0, step=1, limit=4
    $region2: #{forward.1} parent=1 // loop_pre_header
      _
    $region3: #{forward.1} parent=1 // loop_header
      %s12 = sphi 0, %s16
      %p13 = scmp.ge.s32.totalorder %s12, 4
      %s19 = sphi 0, %s31
      %s20 = sphi 0, %s27
      %s21 = sphi 0, %s19
      %s22 = sphi 0, %s20
      %s23 = sphi 0, %s21
      %s24 = sphi 0, %s22
      %s34 = sphi 0, %s36
      %s37 = sphi 0, %s34
      %s38 = sphi 0, %s37
      %s54 = sphi 0, %s38
      %s58 = sphi 0, %s58
      %s60 = sphi 0, %s58
      %s61 = sphi 0, %s60
      %s75 = sphi 0, %s61
      %s81 = sphi 0, %s83
      %s84 = sphi 0, %s81
      %s85 = sphi 0, %s84
      %s101 = sphi 0, %s85
      %s109 = sphi 0, %s111
      %s112 = sphi 0, %s109
      %s113 = sphi 0, %s112
      %s129 = sphi 0, %s113
    $region4: #{forward.1} parent=1 // loop_header_branch
      %15 = sbr.rel (%p13) target = $region8
    $region5: #{forward.1} parent=1 // loop_body
      %s17 = ssub.s32 %s12, 1
      %s18 = ssub.s32 %s12, 2
      %s25 = sadd.s32 1, %s20
      %p26 = scmp.ge.s32.totalorder %s25, 2
      %s27 = scalar_select %p26, 0, %s25
      %s28 = sadd.s32 1, %s19
      %s29 = scalar_select %p26, %s28, %s19
      %p30 = scmp.ge.s32.totalorder %s29, 1
      %s31 = scalar_select %p30, 0, %s29
      %s32 = ssub.s32 %s20, %s27
      %p33 = scmp.eq.s32.totalorder %s32, 0
      %s35 = sadd.s32 %s34, 1
      %s36 = scalar_select %p33, %s34, %s35
      %p39 = pneg %p33
      %p40 = scmp.eq.s32.totalorder %s12, 1
      %p41 = por %p39, %p40
      %p42 = scmp.ne.s32.totalorder %s34, %s37
      %p43 = scmp.eq.s32.totalorder %s12, 0
      %p44 = por %p42, %p43
      %p45 = scmp.ne.s32.totalorder %s34, %s37
      %p46 = scmp.eq.s32.totalorder %s17, 1
      %p47 = por %p45, %p46
      %p48 = scmp.ne.s32.totalorder %s37, %s38
      %p49 = scmp.eq.s32.totalorder %s17, 0
      %p50 = por %p48, %p49
      %p51 = scmp.ne.s32.totalorder %s37, %s38
      %p52 = scmp.eq.s32.totalorder %s18, 1
      %p53 = por %p51, %p52
      %p55 = scmp.ne.s32.totalorder %s38, %s54
      %p56 = scmp.eq.s32.totalorder %s18, 0
      %p57 = por %p55, %p56
      %s59 = sadd.s32 %s58, 1
      %p62 = scmp.eq.s32.totalorder %s12, 1
      %p63 = scmp.ne.s32.totalorder %s58, %s60
      %p64 = scmp.eq.s32.totalorder %s12, 0
      %p65 = por %p63, %p64
      %p66 = scmp.ne.s32.totalorder %s58, %s60
      %p67 = scmp.eq.s32.totalorder %s17, 1
      %p68 = por %p66, %p67
      %p69 = scmp.ne.s32.totalorder %s60, %s61
      %p70 = scmp.eq.s32.totalorder %s17, 0
      %p71 = por %p69, %p70
      %p72 = scmp.ne.s32.totalorder %s60, %s61
      %p73 = scmp.eq.s32.totalorder %s18, 1
      %p74 = por %p72, %p73
      %p76 = scmp.ne.s32.totalorder %s61, %s75
      %p77 = scmp.eq.s32.totalorder %s18, 0
      %p78 = por %p76, %p77
      %s79 = ssub.s32 %s19, %s31
      %p80 = scmp.eq.s32.totalorder %s79, 0
      %s82 = sadd.s32 %s81, 1
      %s83 = scalar_select %p80, %s81, %s82
      %p86 = pneg %p80
      %p87 = scmp.eq.s32.totalorder %s12, 1
      %p88 = por %p86, %p87
      %p89 = scmp.ne.s32.totalorder %s81, %s84
      %p90 = scmp.eq.s32.totalorder %s12, 0
      %p91 = por %p89, %p90
      %p92 = scmp.ne.s32.totalorder %s81, %s84
      %p93 = scmp.eq.s32.totalorder %s17, 1
      %p94 = por %p92, %p93
      %p95 = scmp.ne.s32.totalorder %s84, %s85
      %p96 = scmp.eq.s32.totalorder %s17, 0
      %p97 = por %p95, %p96
      %p98 = scmp.ne.s32.totalorder %s84, %s85
      %p99 = scmp.eq.s32.totalorder %s18, 1
      %p100 = por %p98, %p99
      %p102 = scmp.ne.s32.totalorder %s85, %s101
      %p103 = scmp.eq.s32.totalorder %s18, 0
      %p104 = por %p102, %p103
      %s105 = ssub.s32 %s20, %s27
      %s106 = ssub.s32 %s19, %s31
      %s107 = sor.u32 %s105, %s106
      %p108 = scmp.eq.s32.totalorder %s107, 0
      %s110 = sadd.s32 %s109, 1
      %s111 = scalar_select %p108, %s109, %s110
      %p114 = pneg %p108
      %p115 = scmp.eq.s32.totalorder %s12, 1
      %p116 = por %p114, %p115
      %p117 = scmp.ne.s32.totalorder %s109, %s112
      %p118 = scmp.eq.s32.totalorder %s12, 0
      %p119 = por %p117, %p118
      %p120 = scmp.ne.s32.totalorder %s109, %s112
      %p121 = scmp.eq.s32.totalorder %s17, 1
      %p122 = por %p120, %p121
      %p123 = scmp.ne.s32.totalorder %s112, %s113
      %p124 = scmp.eq.s32.totalorder %s17, 0
      %p125 = por %p123, %p124
      %p126 = scmp.ne.s32.totalorder %s112, %s113
      %p127 = scmp.eq.s32.totalorder %s18, 1
      %p128 = por %p126, %p127
      %p130 = scmp.ne.s32.totalorder %s113, %s129
      %p131 = scmp.eq.s32.totalorder %s18, 0
      %p132 = por %p130, %p131
      %p133 = scmp.le.s32.totalorder 1, %s12
      %p134 = scmp.lt.s32.totalorder %s12, 3
      %p135 = pnand %p133, %p134
      %p136 = pneg %p135
      // Predicated region
      $region9: #{forward.1} parent=5 // pred_check
        _
      $region10: #{forward.1} parent=5 // pred_check_branch
        %138 = sbr.rel (%p135) target = $region12
      $region11: #{forward.1} parent=5 // pred_region
        %s139 = ssub.s32 %s12, 1
        // Predicated region
        $region13: #{forward.1} parent=11 // pred_check
          %p140 = pneg %p71
        $region14: #{forward.1} parent=11 // pred_check_branch
          %142 = sbr.rel (%p140) target = $region16
        $region15: #{forward.1} parent=11 // pred_region
          _
        $region16: #{forward.1} parent=11 // pred_fallthru
          _
        // Predicated region
        $region17: #{forward.1} parent=11 // pred_check
          %p143 = pneg %p97
        $region18: #{forward.1} parent=11 // pred_check_branch
          %145 = sbr.rel (%p143) target = $region20
        $region19: #{forward.1} parent=11 // pred_region
          %p146 = scmp.lt.s32.totalorder %s21, 0
          %s147 = scalar_select %p146, %s21, 0
          %s148 = smul.addr %s147, 4
          %s149 = scalar_lea.vmem %s2, %s148
        $region20: #{forward.1} parent=11 // pred_fallthru
          _
      $region12: #{forward.1} parent=5 // pred_fallthru
        _
      %p150 = scmp.lt.s32.totalorder %s12, 2
      // Predicated region
      $region21: #{forward.1} parent=5 // pred_check
        %p151 = pneg %p150
      $region22: #{forward.1} parent=5 // pred_check_branch
        %153 = sbr.rel (%p151) target = $region24
      $region23: #{forward.1} parent=5 // pred_region
        // Predicated region
        $region25: #{forward.1} parent=23 // pred_check
          %p154 = pneg %p44
        $region26: #{forward.1} parent=23 // pred_check_branch
          %156 = sbr.rel (%p154) target = $region28
        $region27: #{forward.1} parent=23 // pred_region
          %p157 = scmp.lt.s32.totalorder %s20, 1
          %s158 = scalar_select %p157, %s20, 1
          %s159 = smul.addr %s158, 2
          %s160 = smul.addr %s159, 4
          %s161 = scalar_lea.vmem %s0, %s160
        $region28: #{forward.1} parent=23 // pred_fallthru
          _
      $region24: #{forward.1} parent=5 // pred_fallthru
        _
      %p162 = scmp.le.s32.totalorder 1, %s12
      %p163 = scmp.lt.s32.totalorder %s12, 3
      %p164 = pnand %p162, %p163
      %p165 = pneg %p164
      // Predicated region
      $region29: #{forward.1} parent=5 // pred_check
        _
      $region30: #{forward.1} parent=5 // pred_check_branch
        %167 = sbr.rel (%p164) target = $region32
      $region31: #{forward.1} parent=5 // pred_region
        %s168 = ssub.s32 %s12, 1
        %p169 = scmp.lt.s32.totalorder %s22, 1
        %s170 = scalar_select %p169, %s22, 1
        %s171 = smul.addr %s170, 2
        %s172 = smul.addr %s171, 4
        %s173 = scalar_lea.vmem %s0, %s172
        %p174 = pneg %p50
        %p175 = pneg %p47
        %p176 = pneg %p71
        %p177 = pneg %p68
        %p178 = scmp.lt.s32.totalorder %s21, 0
        %s179 = scalar_select %p178, %s21, 0
        %s180 = smul.addr %s179, 4
        %s181 = scalar_lea.vmem %s2, %s180
        %p182 = pneg %p97
        %p183 = pneg %p94
        %p184 = pneg %p125
        %p185 = pneg %p122
        %s186 = sand.u32 %s112, 1
        %s187 = scalar_lea.sflag [#allocation3], %s186
        %s188 = sand.u32 %s112, 1
        %s189 = smul.addr %s188, 8
        %s190 = scalar_lea.vmem [#allocation2], %s189
        %p191 = scmp.lt.s32.totalorder %s22, 1
        %s192 = scalar_select %p191, %s22, 1
        %s193 = smul.addr %s192, 2
        %s194 = smul.addr %s193, 4
        %s195 = scalar_lea.vmem %s0, %s194
        %p196 = scmp.lt.s32.totalorder %s21, 0
        %s197 = scalar_select %p196, %s21, 0
        %s198 = smul.addr %s197, 4
        %s199 = scalar_lea.vmem %s2, %s198
        %s201 = smul.u32 %s21, 8
        %s202 = sshra.s32 %s201, 3
        %s203 = sand.u32 %s201, 7
        %s204 = smul.addr %s202, 4
        %s205 = scalar_lea.vmem %s195, %s204
        %v206 = vld [vmem:[%s205] sm:$0xf]
        %v207 = vld [vmem:[%s205 + $0x4] sm:$0x1]
        %v210 = vunpack.c.l.b16 %v206
        %v211 = vunpack.c.l.b16 %v207
        %v212 = vpack.c.b16 %v211, %v210
        %v214 = vshrl.u32 %v212, 16
        %v216 = vshll.u32 %v212, 16
        %v218 = vrot.slane %v216, 1
        %v219 = vor.u32 %v214, %v218
        %220 = vrot.lane.b32.xlu0 %v219, 4
        %v221 = vpop.permute.xlu0 %220
        %v222 = vrot.slane %v212, 1
        %223 = vrot.lane.b32.xlu0 %v222, 8
        %v224 = vpop.permute.xlu0 %223
        %vm225 = vcmask 31744
        %v228 = vsel %vm225, %v206, %v221
        %vm229 = vcmask 64512
        %v231 = vsel %vm229, %v228, %v224
        %v232 = vld [vmem:[%s1] sm:$0xf]
        %v233 = vld [vmem:[%s1 + $0x4] sm:$0x3]
        %v234 = vld [vmem:[%s199] sm:$0xf]
        %v235 = vunpack.c.l.bf16 %v234
        %v238 = vunpack.c.l.b16 %v232
        %v239 = vunpack.c.l.b16 %v233
        %v240 = vpack.c.b16 %v239, %v238
        %vm241 = vcmask 97280
        %v242 = vsel %vm241, %v231, 0
        %vm244 = vcmask 1045504
        %v246 = vsel %vm244, %v240, 0
        %248 = vmatprep.subr.bf16.mxu0 0
        %249 = vmatpush1.bf16.msra.mxu0 %v246
        %250 = vmatprep.subr.bf16.mxu0 0
        %251 = vmatpush1.bf16.msra.mxu0 0
        %252 = vmatprep.subr.bf16.mxu0 0
        %253 = vmatpush1.bf16.msra.mxu0 0
        %254 = vmatprep.subr.bf16.mxu0 0
        %255 = vmatpush1.bf16.msra.mxu0 0
        %256 = vmatprep.subr.bf16.mxu0 0
        %257 = vmatpush1.bf16.msra.mxu0 0
        %258 = vmatprep.subr.bf16.mxu0 0
        %259 = vmatpush1.bf16.msra.mxu0 0
        %260 = vmatprep.subr.bf16.mxu0 0
        %261 = vmatpush1.bf16.msra.mxu0 0
        %262 = vmatprep.subr.bf16.mxu0 0
        %263 = vmatpush1.bf16.msra.mxu0 0
        %264 = vmatprep.subr.bf16.mxu0 0
        %265 = vmatpush1.bf16.msra.mxu0 0
        %266 = vmatprep.subr.bf16.mxu0 0
        %267 = vmatpush1.bf16.msra.mxu0 0
        %268 = vmatprep.subr.bf16.mxu0 0
        %269 = vmatpush1.bf16.msra.mxu0 0
        %270 = vmatprep.subr.bf16.mxu0 0
        %271 = vmatpush1.bf16.msra.mxu0 0
        %272 = vmatprep.subr.bf16.mxu0 0
        %273 = vmatpush1.bf16.msra.mxu0 0
        %274 = vmatprep.subr.bf16.mxu0 0
        %275 = vmatpush1.bf16.msra.mxu0 0
        %276 = vmatprep.subr.bf16.mxu0 0
        %277 = vmatpush1.bf16.msra.mxu0 0
        %278 = vmatprep.subr.bf16.mxu0 0
        %279 = vmatpush1.bf16.msra.mxu0 0
        %280 = vmatprep.mubr.bf16.mxu0 0
        %281 = vmatmul.mubr.bf16.gmra.mrb[0].mxu0 %v242
        %v282 = vpop.f32.mrb[0].mxu0
        %v283 = vadd.f32 %v235, %v282
        %v284 = vpop.f32.mrb[0].mxu0
        %v285 = vpop.f32.mrb[0].mxu0
        %v286 = vpop.f32.mrb[0].mxu0
        %287 = vdwg.mxu0
        %288 = vst [vmem:[%s190] sm:$0xff] %v283
        %s289 = sand.u32 %s112, 1
        %s290 = scalar_lea.sflag [#allocation3], %s289
        %s291 = sand.u32 %s112, 1
        %s292 = smul.addr %s291, 8
        %s293 = scalar_lea.vmem [#allocation2], %s292
        // Predicated region
        $region33: #{forward.1} parent=31 // pred_check
          %p294 = pneg %p122
        $region34: #{forward.1} parent=31 // pred_check_branch
          %296 = sbr.rel (%p294) target = $region36
        $region35: #{forward.1} parent=31 // pred_region
          %s298 = ssub.s32 128, 128
          %299 = vsyncadd %s290, %s298
          %s300 = sadd.s32 %s21, %s22
          %s301 = smul.addr %s300, 128
          %s302 = scalar_lea.hbm %s3, %s301
          %s304 = sshll.u32 %s293, 4
          %s305 = int_to_ptr.vmem [resolvable:$true] %s304
          %307 = dma.vmem_to_hbm [thread:$0]  %s305, 128, %s302, %s290
        $region36: #{forward.1} parent=31 // pred_fallthru
          _
      $region32: #{forward.1} parent=5 // pred_fallthru
        _
      %p308 = scmp.le.s32.totalorder 2, %s12
      // Predicated region
      $region37: #{forward.1} parent=5 // pred_check
        %p309 = pneg %p308
      $region38: #{forward.1} parent=5 // pred_check_branch
        %311 = sbr.rel (%p309) target = $region40
      $region39: #{forward.1} parent=5 // pred_region
        %s312 = ssub.s32 %s12, 2
        // Predicated region
        $region41: #{forward.1} parent=39 // pred_check
          %p313 = pneg %p128
        $region42: #{forward.1} parent=39 // pred_check_branch
          %315 = sbr.rel (%p313) target = $region44
        $region43: #{forward.1} parent=39 // pred_region
          %s316 = sand.u32 %s113, 1
          %s317 = scalar_lea.sflag [#allocation3], %s316
          %s318 = sand.u32 %s113, 1
          %s319 = smul.addr %s318, 8
          %s320 = scalar_lea.vmem [#allocation2], %s319
          %321 = dma.done %s317, 128
        $region44: #{forward.1} parent=39 // pred_fallthru
          _
      $region40: #{forward.1} parent=5 // pred_fallthru
        _
    $region6: #{forward.1} parent=1 // loop_footer
      %s16 = sadd.s32 1, %s12
    $region7: #{forward.1} parent=1 // loop_footer_branch
      %11 = sbr.rel target = $region3
    $region8: #{forward.1} parent=1 // loop_exit
      _
    %322 = vsyncpa [#allocation3], 1
    %s323 = scalar_lea.sflag [#allocation3], 1
    %324 = vsyncpa %s323, 1

</llo_original>
